<compile_context>
chip_gen: v5e
topology: v5e:2x2
jax: 0.10.0
libtpu: 0.0.40
codegen_flags: <defaults>
</compile_context>

<pallas_src>
import jax
import jax.numpy as jnp
import numpy as np
from jax.experimental import pallas as pl
from jax.experimental.pallas import tpu as pltpu


def gphi_pool_kernel(x_ref, wgp_ref, bgp_ref, gp_ref):
    """Fused g|phi 1x1 conv + 2x2 max-pool for one batch image.

    x_ref:   (1, H, W, C)    f32   full NHWC image of this batch
    wgp_ref: (C, 2*Ci)       bf16  g and phi weights concatenated on the out axis
    bgp_ref: (1, 2*Ci)       f32
    gp_ref:  (1, Nkv, 2*Ci)  bf16  pooled g|phi, Nkv = (H/2)*(W/2)
    """
    _, H, W, C = x_ref.shape
    Hh, Wh = H // 2, W // 2
    Nkv = Hh * Wh
    xf = x_ref[0].reshape(Hh, 2, Wh, 2, C)
    acc = None
    for dy in range(2):                      # static 2x2 window loop
        for dx in range(2):
            xk = xf[:, dy, :, dx, :].reshape(Nkv, C).astype(jnp.bfloat16)
            r = jnp.dot(xk, wgp_ref[...], preferred_element_type=jnp.float32)
            acc = r if acc is None else jnp.maximum(acc, r)
    # bias commutes with the max (same bias for every window pixel)
    gp_ref[0] = (acc + bgp_ref[...]).astype(gp_ref.dtype)


def nonlocal_kernel(xq_ref, g_ref, phit_ref, wt_ref, bt_ref,
                    ww_ref, bw_ref, s_ref, t_ref, z_ref):
    """Attention + W conv + BN + residual for one (batch, query-row-tile).

    xq_ref:   (1, QR, W, C)  f32   query tile of x (NHWC rows)
    g_ref:    (1, Nkv, Ci)   bf16  pooled g(x)
    phit_ref: (1, Ci, Nkv)   bf16  pooled phi(x), PRE-transposed (lane-dense RHS)
    wt/bt:    theta 1x1 conv (C,Ci) bf16 / (1,Ci) f32
    ww/bw:    W 1x1 conv     (Ci,C) bf16 / (1,C) f32
    s/t:      folded eval-mode BN scale/shift (1,C) f32
    z_ref:    (1, QR, W, C)  f32 output tile
    """
    _, QR, W, C = xq_ref.shape
    Ci = wt_ref.shape[1]
    TQ = QR * W

    xq_f32 = xq_ref[0].reshape(TQ, C)                  # f32, kept for the residual
    xq = xq_f32.astype(jnp.bfloat16)

    theta = jnp.dot(xq, wt_ref[...],
                    preferred_element_type=jnp.float32) + bt_ref[...]      # (TQ, Ci)

    # f = theta @ phi^T -- phi already stored as (Ci, Nkv): plain MXU feed.
    f = jnp.dot(theta.astype(jnp.bfloat16), phit_ref[0],
                preferred_element_type=jnp.float32)                        # (TQ, Nkv)

    # softmax over the pooled key axis (f32)
    f = f - jnp.max(f, axis=-1, keepdims=True)
    p = jnp.exp(f)
    p = p * pl.reciprocal(jnp.sum(p, axis=-1, keepdims=True), approx=True)

    # y = softmax(f) @ g
    y = jnp.dot(p.astype(jnp.bfloat16), g_ref[0],
                preferred_element_type=jnp.float32)                        # (TQ, Ci)

    # W(y) 1x1 conv back to C channels, eval-mode BN, residual
    wy = jnp.dot(y.astype(jnp.bfloat16), ww_ref[...],
                 preferred_element_type=jnp.float32) + bw_ref[...]         # (TQ, C)
    wy = wy * s_ref[...] + t_ref[...]

    z_ref[0] = (wy + xq_f32).reshape(QR, W, C).astype(z_ref.dtype)


def _compiler_params(dims, needed_bytes):
    """Derive a per-generation VMEM limit from actual tile sizes."""
    try:
        cap = int(pltpu.get_tpu_info().vmem_capacity_bytes)
    except Exception:
        cap = 64 * 1024 * 1024            # conservative fallback (v7x per-TC VMEM)
    limit = int(min(int(0.85 * cap), max(32 * 1024 * 1024, 2 * int(needed_bytes))))
    return pltpu.CompilerParams(dimension_semantics=dims,
                                vmem_limit_bytes=limit)


def nonlocal_pallas(x_nchw, params, *, q_rows=8):
    B, C, H, W = x_nchw.shape
    Ci = params["wt"].shape[1]
    assert H % 2 == 0 and W % 2 == 0, "sub_sample=True needs even H, W"
    QR = min(q_rows, H)
    assert H % QR == 0, "query row tile must divide H"
    Hh, Wh = H // 2, W // 2
    Nkv = Hh * Wh
    NQ = H // QR
    TQ = QR * W

    # ---- layout plumbing ----
    x_nhwc = jnp.transpose(x_nchw, (0, 2, 3, 1))          # (B, H, W, C)

    # bf16 weights for the MXU; biases / BN stay f32.  g & phi fused.
    wt = params["wt"].astype(jnp.bfloat16)
    ww = params["ww"].astype(jnp.bfloat16)
    wgp = jnp.concatenate([params["wg"], params["wp"]], axis=1).astype(jnp.bfloat16)
    bgp = jnp.concatenate([params["bg"], params["bp"]], axis=1).astype(jnp.float32)

    # ---- pass 1: per-batch pooled g|phi projection ----
    pool_needed = (2 * H * W * C * 4            # x image, double-buffered
                   + 2 * Nkv * 2 * Ci * 2       # fused output, double-buffered
                   + C * 2 * Ci * 2             # weights
                   + (1 << 20))                 # headroom
    gphi = pl.pallas_call(
        gphi_pool_kernel,
        out_shape=jax.ShapeDtypeStruct((B, Nkv, 2 * Ci), jnp.bfloat16),
        grid=(B,),
        in_specs=[
            pl.BlockSpec((1, H, W, C), lambda b: (b, 0, 0, 0)),
            pl.BlockSpec((C, 2 * Ci), lambda b: (0, 0)),
            pl.BlockSpec((1, 2 * Ci), lambda b: (0, 0)),
        ],
        out_specs=pl.BlockSpec((1, Nkv, 2 * Ci), lambda b: (b, 0, 0)),
        compiler_params=_compiler_params(("parallel",), pool_needed),
    )(x_nhwc, wgp, bgp)

    # Once-per-forward wrapper plumbing: split the fused projection and
    # pre-transpose phi so the attention kernel gets a lane-dense (Ci, Nkv) RHS.
    g_x = gphi[:, :, :Ci]                                 # (B, Nkv, Ci) bf16
    phi_t = jnp.swapaxes(gphi[:, :, Ci:], 1, 2)           # (B, Ci, Nkv) bf16

    # ---- pass 2: attention / softmax / W / BN / residual over query tiles ----
    attn_needed = (2 * 2 * TQ * C * 4           # x tile + z tile, double-buffered
                   + 2 * 2 * Nkv * Ci * 2       # g + phi^T (bf16), double-buffered
                   + 2 * (C * Ci + Ci * C) * 2  # theta / W weights
                   + 3 * TQ * Nkv * 4           # softmax working set (f32)
                   + (1 << 20))                 # headroom
    bcast2 = lambda b, q: (0, 0)
    z_nhwc = pl.pallas_call(
        nonlocal_kernel,
        out_shape=jax.ShapeDtypeStruct((B, H, W, C), x_nchw.dtype),
        grid=(B, NQ),
        in_specs=[
            pl.BlockSpec((1, QR, W, C), lambda b, q: (b, q, 0, 0)),   # x query tile
            pl.BlockSpec((1, Nkv, Ci), lambda b, q: (b, 0, 0)),       # g (per batch)
            pl.BlockSpec((1, Ci, Nkv), lambda b, q: (b, 0, 0)),       # phi^T (per batch)
            pl.BlockSpec((C, Ci), bcast2), pl.BlockSpec((1, Ci), bcast2),   # theta
            pl.BlockSpec((Ci, C), bcast2), pl.BlockSpec((1, C), bcast2),    # W
            pl.BlockSpec((1, C), bcast2),  pl.BlockSpec((1, C), bcast2),    # BN
        ],
        out_specs=pl.BlockSpec((1, QR, W, C), lambda b, q: (b, q, 0, 0)),
        compiler_params=_compiler_params(("parallel", "parallel"), attn_needed),
    )(x_nhwc, g_x, phi_t, wt, params["bt"], ww, params["bw"],
      params["bn_scale"], params["bn_shift"])

    return jnp.transpose(z_nhwc, (0, 3, 1, 2))            # back to NCHW


def nonlocal_ref(x_nchw, params):
    """Pure-JAX f32 reference of the PyTorch forward (eval-mode BN)."""
    B, C, H, W = x_nchw.shape
    xn = jnp.transpose(x_nchw, (0, 2, 3, 1))
    xf = xn.reshape(B, H * W, C)
    theta = xf @ params["wt"] + params["bt"]
    g_full = xf @ params["wg"] + params["bg"]
    phi_full = xf @ params["wp"] + params["bp"]

    def pool(a):
        k = a.shape[-1]
        a = a.reshape(B, H, W, k).reshape(B, H // 2, 2, W // 2, 2, k).max(axis=(2, 4))
        return a.reshape(B, (H // 2) * (W // 2), k)

    g_x, phi_x = pool(g_full), pool(phi_full)
    f = jnp.einsum("bqc,bkc->bqk", theta, phi_x)
    fdc = jax.nn.softmax(f, axis=-1)
    y = jnp.einsum("bqk,bkc->bqc", fdc, g_x)
    wy = y @ params["ww"] + params["bw"]
    wy = wy * params["bn_scale"] + params["bn_shift"]
    z = wy + xf
    return jnp.transpose(z.reshape(B, H, W, C), (0, 3, 1, 2))


def make_params(key, C, Ci):
    ks = jax.random.split(key, 12)
    p = {
        # 1x1 conv weights stored as (in, out) for x @ W
        "wt": 0.1 * jax.random.normal(ks[0], (C, Ci), jnp.float32),
        "bt": 0.1 * jax.random.normal(ks[1], (1, Ci), jnp.float32),
        "wg": 0.1 * jax.random.normal(ks[2], (C, Ci), jnp.float32),
        "bg": 0.1 * jax.random.normal(ks[3], (1, Ci), jnp.float32),
        "wp": 0.1 * jax.random.normal(ks[4], (C, Ci), jnp.float32),
        "bp": 0.1 * jax.random.normal(ks[5], (1, Ci), jnp.float32),
        "ww": 0.1 * jax.random.normal(ks[6], (Ci, C), jnp.float32),
        "bw": 0.1 * jax.random.normal(ks[7], (1, C), jnp.float32),
    }
    # Eval-mode BatchNorm folded into scale/shift.  NOTE: the PyTorch __init__
    # sets gamma=beta=0 which makes z == x exactly; we use non-trivial BN stats
    # here so the test actually exercises the attention path (the kernel itself
    # is agnostic to the BN parameter values).
    gamma = 0.5 * jax.random.normal(ks[8], (1, C), jnp.float32)
    beta = 0.1 * jax.random.normal(ks[9], (1, C), jnp.float32)
    rm = 0.1 * jax.random.normal(ks[10], (1, C), jnp.float32)
    rv = 1.0 + 0.1 * jnp.abs(jax.random.normal(ks[11], (1, C), jnp.float32))
    eps = 1e-5
    p["bn_scale"] = gamma / jnp.sqrt(rv + eps)
    p["bn_shift"] = beta - rm * p["bn_scale"]
    return p


if __name__ == "__main__":
    # Small shapes: batch=2, channel_in=32 -> inter_channels=16, spatial 16x16.
    B, C, H, W = 2, 32, 16, 16
    Ci = C // 2

    key = jax.random.PRNGKey(0)
    kx, kp = jax.random.split(key)
    x = jax.random.normal(kx, (B, C, H, W), jnp.float32)
    params = make_params(kp, C, Ci)

    z_ref = nonlocal_ref(x, params)              # f32 reference, computed first

    z = nonlocal_pallas(x, params, q_rows=8)
    z = jax.block_until_ready(z)

    # Looser tolerance than the f32 reference because the kernel feeds the MXU
    # in bf16 (f32 accumulation); softmax/BN/residual stay f32.
    np.testing.assert_allclose(np.asarray(z), np.asarray(z_ref), atol=5e-2, rtol=5e-2)

    print("KERNEL_OK")
</pallas_src>

<mosaic_0001>
module attributes {stable_mosaic.version = 11 : i64} {
  func.func @gphi_pool_kernel(%arg0: i32, %arg1: memref<1x16x16x32xf32, #tpu.memory_space<vmem>>, %arg2: memref<32x32xbf16, #tpu.memory_space<vmem>>, %arg3: memref<1x32xf32, #tpu.memory_space<vmem>>, %arg4: memref<1x64x32xbf16, #tpu.memory_space<vmem>>) attributes {dimension_semantics = [#tpu.dimension_semantics<parallel>], iteration_bounds = array<i64: 2>, scalar_prefetch = 0 : i64, scratch_operands = 0 : i64, tpu.core_type = #tpu.core_type<tc>, window_params = [{transform_indices = @transform_0, window_bounds = array<i64: 1, 16, 16, 32>}, {pipeline_mode = #tpu.pipeline_mode<synchronous>, transform_indices = @transform_1, window_bounds = array<i64: 32, 32>}, {pipeline_mode = #tpu.pipeline_mode<synchronous>, transform_indices = @transform_2, window_bounds = array<i64: 1, 32>}, {transform_indices = @transform_3, window_bounds = array<i64: 1, 64, 32>}]} {
    %c0 = arith.constant 0 : index
    %c0_0 = arith.constant 0 : index
    %c0_1 = arith.constant 0 : index
    %c0_2 = arith.constant 0 : index
    %0 = vector.load %arg1[%c0, %c0_0, %c0_1, %c0_2] : memref<1x16x16x32xf32, #tpu.memory_space<vmem>>, vector<1x16x16x32xf32>
    %1 = vector.shape_cast %0 : vector<1x16x16x32xf32> to vector<16x16x32xf32>
    %2 = vector.shape_cast %1 : vector<16x16x32xf32> to vector<8x2x8x2x32xf32>
    %3 = vector.extract_strided_slice %2 {offsets = [0, 0, 0, 0, 0], sizes = [8, 1, 8, 1, 32], strides = [1, 1, 1, 1, 1]} : vector<8x2x8x2x32xf32> to vector<8x1x8x1x32xf32>
    %4 = vector.shape_cast %3 : vector<8x1x8x1x32xf32> to vector<8x8x32xf32>
    %5 = vector.shape_cast %4 : vector<8x8x32xf32> to vector<64x32xf32>
    %6 = arith.truncf %5 : vector<64x32xf32> to vector<64x32xbf16>
    %c0_3 = arith.constant 0 : index
    %c0_4 = arith.constant 0 : index
    %7 = vector.load %arg2[%c0_3, %c0_4] : memref<32x32xbf16, #tpu.memory_space<vmem>>, vector<32x32xbf16>
    %cst = arith.constant dense<0.000000e+00> : vector<64x32xf32>
    %8 = tpu.matmul %6, %7, %cst {dimension_numbers = #tpu.dot_dimension_numbers<[1], [0], [0], [1], [0, 0, 1, 1], [], []>} : vector<64x32xbf16>, vector<32x32xbf16>, vector<64x32xf32> -> vector<64x32xf32>
    %9 = vector.extract_strided_slice %2 {offsets = [0, 0, 0, 1, 0], sizes = [8, 1, 8, 1, 32], strides = [1, 1, 1, 1, 1]} : vector<8x2x8x2x32xf32> to vector<8x1x8x1x32xf32>
    %10 = vector.shape_cast %9 : vector<8x1x8x1x32xf32> to vector<8x8x32xf32>
    %11 = vector.shape_cast %10 : vector<8x8x32xf32> to vector<64x32xf32>
    %12 = arith.truncf %11 : vector<64x32xf32> to vector<64x32xbf16>
    %c0_5 = arith.constant 0 : index
    %c0_6 = arith.constant 0 : index
    %13 = vector.load %arg2[%c0_5, %c0_6] : memref<32x32xbf16, #tpu.memory_space<vmem>>, vector<32x32xbf16>
    %cst_7 = arith.constant dense<0.000000e+00> : vector<64x32xf32>
    %14 = tpu.matmul %12, %13, %cst_7 {dimension_numbers = #tpu.dot_dimension_numbers<[1], [0], [0], [1], [0, 0, 1, 1], [], []>} : vector<64x32xbf16>, vector<32x32xbf16>, vector<64x32xf32> -> vector<64x32xf32>
    %15 = arith.maximumf %8, %14 : vector<64x32xf32>
    %16 = vector.extract_strided_slice %2 {offsets = [0, 1, 0, 0, 0], sizes = [8, 1, 8, 1, 32], strides = [1, 1, 1, 1, 1]} : vector<8x2x8x2x32xf32> to vector<8x1x8x1x32xf32>
    %17 = vector.shape_cast %16 : vector<8x1x8x1x32xf32> to vector<8x8x32xf32>
    %18 = vector.shape_cast %17 : vector<8x8x32xf32> to vector<64x32xf32>
    %19 = arith.truncf %18 : vector<64x32xf32> to vector<64x32xbf16>
    %c0_8 = arith.constant 0 : index
    %c0_9 = arith.constant 0 : index
    %20 = vector.load %arg2[%c0_8, %c0_9] : memref<32x32xbf16, #tpu.memory_space<vmem>>, vector<32x32xbf16>
    %cst_10 = arith.constant dense<0.000000e+00> : vector<64x32xf32>
    %21 = tpu.matmul %19, %20, %cst_10 {dimension_numbers = #tpu.dot_dimension_numbers<[1], [0], [0], [1], [0, 0, 1, 1], [], []>} : vector<64x32xbf16>, vector<32x32xbf16>, vector<64x32xf32> -> vector<64x32xf32>
    %22 = arith.maximumf %15, %21 : vector<64x32xf32>
    %23 = vector.extract_strided_slice %2 {offsets = [0, 1, 0, 1, 0], sizes = [8, 1, 8, 1, 32], strides = [1, 1, 1, 1, 1]} : vector<8x2x8x2x32xf32> to vector<8x1x8x1x32xf32>
    %24 = vector.shape_cast %23 : vector<8x1x8x1x32xf32> to vector<8x8x32xf32>
    %25 = vector.shape_cast %24 : vector<8x8x32xf32> to vector<64x32xf32>
    %26 = arith.truncf %25 : vector<64x32xf32> to vector<64x32xbf16>
    %c0_11 = arith.constant 0 : index
    %c0_12 = arith.constant 0 : index
    %27 = vector.load %arg2[%c0_11, %c0_12] : memref<32x32xbf16, #tpu.memory_space<vmem>>, vector<32x32xbf16>
    %cst_13 = arith.constant dense<0.000000e+00> : vector<64x32xf32>
    %28 = tpu.matmul %26, %27, %cst_13 {dimension_numbers = #tpu.dot_dimension_numbers<[1], [0], [0], [1], [0, 0, 1, 1], [], []>} : vector<64x32xbf16>, vector<32x32xbf16>, vector<64x32xf32> -> vector<64x32xf32>
    %29 = arith.maximumf %22, %28 : vector<64x32xf32>
    %c0_14 = arith.constant 0 : index
    %c0_15 = arith.constant 0 : index
    %30 = vector.load %arg3[%c0_14, %c0_15] : memref<1x32xf32, #tpu.memory_space<vmem>>, vector<1x32xf32>
    %31 = vector.broadcast %30 : vector<1x32xf32> to vector<64x32xf32>
    %32 = arith.addf %29, %31 : vector<64x32xf32>
    %33 = arith.truncf %32 : vector<64x32xf32> to vector<64x32xbf16>
    %c0_16 = arith.constant 0 : index
    %c0_17 = arith.constant 0 : index
    %c0_18 = arith.constant 0 : index
    %34 = vector.load %arg4[%c0_16, %c0_17, %c0_18] : memref<1x64x32xbf16, #tpu.memory_space<vmem>>, vector<1x64x32xbf16>
    %35 = vector.shape_cast %34 : vector<1x64x32xbf16> to vector<64x32xbf16>
    %36 = vector.shape_cast %33 : vector<64x32xbf16> to vector<1x64x32xbf16>
    tpu.vector_store %arg4[%c0_16, %c0_17, %c0_18], %36 {strides = array<i32>} : memref<1x64x32xbf16, #tpu.memory_space<vmem>>, vector<1x64x32xbf16>,
    return
  }
  func.func @transform_0(%arg0: i32) -> (i32, i32, i32, i32) {
    %c0_i32 = arith.constant 0 : i32
    %c0_i32_0 = arith.constant 0 : i32
    %c0_i32_1 = arith.constant 0 : i32
    %c0_i32_2 = arith.constant 0 : i32
    return %arg0, %c0_i32, %c0_i32_0, %c0_i32_1 : i32, i32, i32, i32
  }
  func.func @transform_1(%arg0: i32) -> (i32, i32) {
    %c0_i32 = arith.constant 0 : i32
    %c0_i32_0 = arith.constant 0 : i32
    %c0_i32_1 = arith.constant 0 : i32
    return %c0_i32, %c0_i32_0 : i32, i32
  }
  func.func @transform_2(%arg0: i32) -> (i32, i32) {
    %c0_i32 = arith.constant 0 : i32
    %c0_i32_0 = arith.constant 0 : i32
    %c0_i32_1 = arith.constant 0 : i32
    return %c0_i32, %c0_i32_0 : i32, i32
  }
  func.func @transform_3(%arg0: i32) -> (i32, i32, i32) {
    %c0_i32 = arith.constant 0 : i32
    %c0_i32_0 = arith.constant 0 : i32
    %c0_i32_1 = arith.constant 0 : i32
    return %arg0, %c0_i32, %c0_i32_0 : i32, i32, i32
  }
}

</mosaic_0001>

<llo_original>
// kernel: tpu_custom_call.1
$region0: #{tpu_custom_call.1}
  #allocation0 [shape = 'u32[]', space=smem, size = 0x4, offset = 0x4, fixed_abs, tag = 'smem constant byte address 0x4 - core index']
  #allocation1 [shape = 'u32[72,128]{1,0:T(1,128)}', space=vmem, size = 0x9000, scoped, tag = 'internal scratch']
  %s0 = inlined_call_operand.hbm [shape: f32[2,16,16,32], index: 0, kind: input, shape index: {}]
  %s1 = inlined_call_operand.hbm [shape: bf16[32,32], index: 1, kind: input, shape index: {}]
  %s2 = inlined_call_operand.vmem [shape: f32[1,32], index: 2, kind: input, shape index: {}]
  %s3 = inlined_call_operand.vmem [shape: bf16[2,64,32], index: 3, kind: output, shape index: {}]
  %s4 = sld [smem:[#allocation0]]
  $region53: #{tpu_custom_call.1} parent=0
    _
  %s6 = ssub.s32 1, %s4
  %s7 = scalar_select 0, %s6, %s4
  $region1: #{tpu_custom_call.1} parent=0
    #allocation2 [shape = 'u8[262144]{0}', space=vmem, size = 0x40000, scoped, tag = 'input window, operand 0']
    #allocation3 [shape = 's32[2]{0}', space=sflag, size = 0x8, scoped, tag = 'scoped memory for tpu_custom_call.1']
    #allocation4 [shape = 'u8[8192]{0}', space=vmem, size = 0x2000, scoped, tag = 'input window, operand 1, single buffered']
    #allocation5 [shape = 's32[1]{0}', space=sflag, size = 0x4, scoped, tag = 'scoped memory for tpu_custom_call.1']
    %8 = vsyncpa [#allocation3], 0
    %s9 = scalar_lea.sflag [#allocation3], 1
    %10 = vsyncpa %s9, 0
    %11 = vsyncpa [#allocation5], 0
    loop: start=0, step=1, limit=4
    $region2: #{tpu_custom_call.1} parent=1 // loop_pre_header
      _
    $region3: #{tpu_custom_call.1} parent=1 // loop_header
      %s13 = sphi 0, %s17
      %p14 = scmp.ge.s32.totalorder %s13, 4
      %s23 = sphi 0, %s25
      %s26 = sphi 0, %s23
      %s27 = sphi 0, %s26
      %s43 = sphi 0, %s27
      %s47 = sphi 0, %s47
      %s49 = sphi 0, %s47
      %s50 = sphi 0, %s49
      %s64 = sphi 0, %s50
      %s68 = sphi 0, %s68
      %s70 = sphi 0, %s68
      %s71 = sphi 0, %s70
      %s85 = sphi 0, %s71
      %s91 = sphi 0, %s93
      %s94 = sphi 0, %s91
      %s95 = sphi 0, %s94
      %s111 = sphi 0, %s95
    $region4: #{tpu_custom_call.1} parent=1 // loop_header_branch
      %16 = sbr.rel (%p14) target = $region8
    $region5: #{tpu_custom_call.1} parent=1 // loop_body
      %s18 = ssub.s32 %s13, 1
      %s19 = ssub.s32 %s13, 2
      %s20 = sadd.s32 %s13, 1
      %s21 = ssub.s32 %s13, %s20
      %p22 = scmp.eq.s32.totalorder %s21, 0
      %s24 = sadd.s32 %s23, 1
      %s25 = scalar_select %p22, %s23, %s24
      %p28 = pneg %p22
      %p29 = scmp.eq.s32.totalorder %s13, 1
      %p30 = por %p28, %p29
      %p31 = scmp.ne.s32.totalorder %s23, %s26
      %p32 = scmp.eq.s32.totalorder %s13, 0
      %p33 = por %p31, %p32
      %p34 = scmp.ne.s32.totalorder %s23, %s26
      %p35 = scmp.eq.s32.totalorder %s18, 1
      %p36 = por %p34, %p35
      %p37 = scmp.ne.s32.totalorder %s26, %s27
      %p38 = scmp.eq.s32.totalorder %s18, 0
      %p39 = por %p37, %p38
      %p40 = scmp.ne.s32.totalorder %s26, %s27
      %p41 = scmp.eq.s32.totalorder %s19, 1
      %p42 = por %p40, %p41
      %p44 = scmp.ne.s32.totalorder %s27, %s43
      %p45 = scmp.eq.s32.totalorder %s19, 0
      %p46 = por %p44, %p45
      %s48 = sadd.s32 %s47, 1
      %p51 = scmp.eq.s32.totalorder %s13, 1
      %p52 = scmp.ne.s32.totalorder %s47, %s49
      %p53 = scmp.eq.s32.totalorder %s13, 0
      %p54 = por %p52, %p53
      %p55 = scmp.ne.s32.totalorder %s47, %s49
      %p56 = scmp.eq.s32.totalorder %s18, 1
      %p57 = por %p55, %p56
      %p58 = scmp.ne.s32.totalorder %s49, %s50
      %p59 = scmp.eq.s32.totalorder %s18, 0
      %p60 = por %p58, %p59
      %p61 = scmp.ne.s32.totalorder %s49, %s50
      %p62 = scmp.eq.s32.totalorder %s19, 1
      %p63 = por %p61, %p62
      %p65 = scmp.ne.s32.totalorder %s50, %s64
      %p66 = scmp.eq.s32.totalorder %s19, 0
      %p67 = por %p65, %p66
      %s69 = sadd.s32 %s68, 1
      %p72 = scmp.eq.s32.totalorder %s13, 1
      %p73 = scmp.ne.s32.totalorder %s68, %s70
      %p74 = scmp.eq.s32.totalorder %s13, 0
      %p75 = por %p73, %p74
      %p76 = scmp.ne.s32.totalorder %s68, %s70
      %p77 = scmp.eq.s32.totalorder %s18, 1
      %p78 = por %p76, %p77
      %p79 = scmp.ne.s32.totalorder %s70, %s71
      %p80 = scmp.eq.s32.totalorder %s18, 0
      %p81 = por %p79, %p80
      %p82 = scmp.ne.s32.totalorder %s70, %s71
      %p83 = scmp.eq.s32.totalorder %s19, 1
      %p84 = por %p82, %p83
      %p86 = scmp.ne.s32.totalorder %s71, %s85
      %p87 = scmp.eq.s32.totalorder %s19, 0
      %p88 = por %p86, %p87
      %s89 = ssub.s32 %s13, %s20
      %p90 = scmp.eq.s32.totalorder %s89, 0
      %s92 = sadd.s32 %s91, 1
      %s93 = scalar_select %p90, %s91, %s92
      %p96 = pneg %p90
      %p97 = scmp.eq.s32.totalorder %s13, 1
      %p98 = por %p96, %p97
      %p99 = scmp.ne.s32.totalorder %s91, %s94
      %p100 = scmp.eq.s32.totalorder %s13, 0
      %p101 = por %p99, %p100
      %p102 = scmp.ne.s32.totalorder %s91, %s94
      %p103 = scmp.eq.s32.totalorder %s18, 1
      %p104 = por %p102, %p103
      %p105 = scmp.ne.s32.totalorder %s94, %s95
      %p106 = scmp.eq.s32.totalorder %s18, 0
      %p107 = por %p105, %p106
      %p108 = scmp.ne.s32.totalorder %s94, %s95
      %p109 = scmp.eq.s32.totalorder %s19, 1
      %p110 = por %p108, %p109
      %p112 = scmp.ne.s32.totalorder %s95, %s111
      %p113 = scmp.eq.s32.totalorder %s19, 0
      %p114 = por %p112, %p113
      %p115 = scmp.le.s32.totalorder 1, %s13
      %p116 = scmp.lt.s32.totalorder %s13, 3
      %p117 = pnand %p115, %p116
      %p118 = pneg %p117
      // Predicated region
      $region9: #{tpu_custom_call.1} parent=5 // pred_check
        _
      $region10: #{tpu_custom_call.1} parent=5 // pred_check_branch
        %120 = sbr.rel (%p117) target = $region12
      $region11: #{tpu_custom_call.1} parent=5 // pred_region
        %s121 = ssub.s32 %s13, 1
        // Predicated region
        $region13: #{tpu_custom_call.1} parent=11 // pred_check
          %p122 = pneg %p60
        $region14: #{tpu_custom_call.1} parent=11 // pred_check_branch
          %124 = sbr.rel (%p122) target = $region16
        $region15: #{tpu_custom_call.1} parent=11 // pred_region
          %126 = vsyncadd [#allocation5], 0
          %s127 = sshll.u32 %s1, 4
          %s128 = int_to_ptr.hbm [resolvable:$true] %s127
          %s129 = sshll.u32 [#allocation4], 4
          %s130 = int_to_ptr.vmem [resolvable:$true] %s129
          %135 = dma.hbm_to_vmem [thread:$0]  %s128, 256, %s130, [#allocation5], 64, 64, 4
        $region16: #{tpu_custom_call.1} parent=11 // pred_fallthru
          _
        // Predicated region
        $region17: #{tpu_custom_call.1} parent=11 // pred_check
          %p136 = pneg %p81
        $region18: #{tpu_custom_call.1} parent=11 // pred_check_branch
          %138 = sbr.rel (%p136) target = $region20
        $region19: #{tpu_custom_call.1} parent=11 // pred_region
          _
        $region20: #{tpu_custom_call.1} parent=11 // pred_fallthru
          _
      $region12: #{tpu_custom_call.1} parent=5 // pred_fallthru
        _
      %p139 = scmp.lt.s32.totalorder %s13, 2
      // Predicated region
      $region21: #{tpu_custom_call.1} parent=5 // pred_check
        %p140 = pneg %p139
      $region22: #{tpu_custom_call.1} parent=5 // pred_check_branch
        %142 = sbr.rel (%p140) target = $region24
      $region23: #{tpu_custom_call.1} parent=5 // pred_region
        // Predicated region
        $region25: #{tpu_custom_call.1} parent=23 // pred_check
          %p143 = pneg %p33
        $region26: #{tpu_custom_call.1} parent=23 // pred_check_branch
          %145 = sbr.rel (%p143) target = $region28
        $region27: #{tpu_custom_call.1} parent=23 // pred_region
          %s146 = sand.u32 %s23, 1
          %s147 = scalar_lea.sflag [#allocation3], %s146
          %s148 = sand.u32 %s23, 1
          %s149 = smul.addr %s148, 256
          %s150 = scalar_lea.vmem [#allocation2], %s149
          %152 = vsyncadd %s147, 0
          %s153 = smul.addr %s13, 32
          %s154 = smul.addr %s153, 8
          %s155 = scalar_lea.hbm %s0, %s154
          %s156 = sshll.u32 %s155, 4
          %s157 = int_to_ptr.hbm [resolvable:$true] %s156
          %s158 = sshll.u32 %s150, 4
          %s159 = int_to_ptr.vmem [resolvable:$true] %s158
          %164 = dma.hbm_to_vmem [thread:$0]  %s157, 4096, %s159, %s147, 128, 128, 8
        $region28: #{tpu_custom_call.1} parent=23 // pred_fallthru
          _
      $region24: #{tpu_custom_call.1} parent=5 // pred_fallthru
        _
      %p165 = scmp.le.s32.totalorder 1, %s13
      %p166 = scmp.lt.s32.totalorder %s13, 3
      %p167 = pnand %p165, %p166
      %p168 = pneg %p167
      // Predicated region
      $region29: #{tpu_custom_call.1} parent=5 // pred_check
        _
      $region30: #{tpu_custom_call.1} parent=5 // pred_check_branch
        %170 = sbr.rel (%p167) target = $region32
      $region31: #{tpu_custom_call.1} parent=5 // pred_region
        %s171 = ssub.s32 %s13, 1
        %s172 = sand.u32 %s26, 1
        %s173 = scalar_lea.sflag [#allocation3], %s172
        %s174 = sand.u32 %s26, 1
        %s175 = smul.addr %s174, 256
        %s176 = scalar_lea.vmem [#allocation2], %s175
        // Predicated region
        $region33: #{tpu_custom_call.1} parent=31 // pred_check
          %p177 = pneg %p39
        $region34: #{tpu_custom_call.1} parent=31 // pred_check_branch
          %179 = sbr.rel (%p177) target = $region36
        $region35: #{tpu_custom_call.1} parent=31 // pred_region
          %181 = dma.done %s173, 4096
        $region36: #{tpu_custom_call.1} parent=31 // pred_fallthru
          _
        // Predicated region
        $region37: #{tpu_custom_call.1} parent=31 // pred_check
          %p182 = pneg %p60
        $region38: #{tpu_custom_call.1} parent=31 // pred_check_branch
          %184 = sbr.rel (%p182) target = $region40
        $region39: #{tpu_custom_call.1} parent=31 // pred_region
          %186 = dma.done [#allocation5], 256
        $region40: #{tpu_custom_call.1} parent=31 // pred_fallthru
          _
        %s187 = sand.u32 %s26, 1
        %s188 = scalar_lea.sflag [#allocation3], %s187
        %s189 = sand.u32 %s26, 1
        %s190 = smul.addr %s189, 256
        %s191 = scalar_lea.vmem [#allocation2], %s190
        %p192 = pneg %p39
        %p193 = pneg %p36
        %p194 = pneg %p60
        %p195 = pneg %p57
        %p196 = pneg %p81
        %p197 = pneg %p78
        %p198 = pneg %p107
        %p199 = pneg %p104
        %p200 = scmp.lt.s32.totalorder %s18, 1
        %s201 = scalar_select %p200, %s18, 1
        %s202 = smul.addr %s201, 8
        %s203 = smul.addr %s202, 4
        %s204 = scalar_lea.vmem %s3, %s203
        %p205 = scmp.lt.s32.totalorder %s18, 1
        %s206 = scalar_select %p205, %s18, 1
        %s207 = smul.addr %s206, 8
        %s208 = smul.addr %s207, 4
        %s209 = scalar_lea.vmem %s3, %s208
        %v211 = vld [vmem:[%s176] sm:$0xff]
        %v212 = vld [vmem:[%s176 + $0x8] sm:$0xff]
        %v213 = vld [vmem:[%s176 + $0x10] sm:$0xff]
        %v214 = vld [vmem:[%s176 + $0x18] sm:$0xff]
        %v215 = vld [vmem:[%s176 + $0x20] sm:$0xff]
        %v216 = vld [vmem:[%s176 + $0x28] sm:$0xff]
        %v217 = vld [vmem:[%s176 + $0x30] sm:$0xff]
        %v218 = vld [vmem:[%s176 + $0x38] sm:$0xff]
        %v219 = vld [vmem:[%s176 + $0x40] sm:$0xff]
        %v220 = vld [vmem:[%s176 + $0x48] sm:$0xff]
        %v221 = vld [vmem:[%s176 + $0x50] sm:$0xff]
        %v222 = vld [vmem:[%s176 + $0x58] sm:$0xff]
        %v223 = vld [vmem:[%s176 + $0x60] sm:$0xff]
        %v224 = vld [vmem:[%s176 + $0x68] sm:$0xff]
        %v225 = vld [vmem:[%s176 + $0x70] sm:$0xff]
        %v226 = vld [vmem:[%s176 + $0x78] sm:$0xff]
        %v227 = vld [vmem:[%s176 + $0x80] sm:$0xff]
        %v228 = vld [vmem:[%s176 + $0x88] sm:$0xff]
        %v229 = vld [vmem:[%s176 + $0x90] sm:$0xff]
        %v230 = vld [vmem:[%s176 + $0x98] sm:$0xff]
        %v231 = vld [vmem:[%s176 + $0xa0] sm:$0xff]
        %v232 = vld [vmem:[%s176 + $0xa8] sm:$0xff]
        %v233 = vld [vmem:[%s176 + $0xb0] sm:$0xff]
        %v234 = vld [vmem:[%s176 + $0xb8] sm:$0xff]
        %v235 = vld [vmem:[%s176 + $0xc0] sm:$0xff]
        %v236 = vld [vmem:[%s176 + $0xc8] sm:$0xff]
        %v237 = vld [vmem:[%s176 + $0xd0] sm:$0xff]
        %v238 = vld [vmem:[%s176 + $0xd8] sm:$0xff]
        %v239 = vld [vmem:[%s176 + $0xe0] sm:$0xff]
        %v240 = vld [vmem:[%s176 + $0xe8] sm:$0xff]
        %v241 = vld [vmem:[%s176 + $0xf0] sm:$0xff]
        %v242 = vld [vmem:[%s176 + $0xf8] sm:$0xff]
        %v275 = vrot.slane %v211, 2
        %v276 = vrot.slane %v211, 4
        %v277 = vrot.slane %v211, 6
        %v278 = vrot.slane %v212, 2
        %v279 = vrot.slane %v212, 4
        %v280 = vrot.slane %v212, 6
        %v281 = vrot.slane %v213, 2
        %v282 = vrot.slane %v213, 4
        %v283 = vrot.slane %v213, 6
        %v284 = vrot.slane %v214, 2
        %v285 = vrot.slane %v214, 4
        %v286 = vrot.slane %v214, 6
        %v287 = vrot.slane %v215, 2
        %v288 = vrot.slane %v215, 4
        %v289 = vrot.slane %v215, 6
        %v290 = vrot.slane %v216, 2
        %v291 = vrot.slane %v216, 4
        %v292 = vrot.slane %v216, 6
        %v293 = vrot.slane %v217, 2
        %v294 = vrot.slane %v217, 4
        %v295 = vrot.slane %v217, 6
        %v296 = vrot.slane %v218, 2
        %v297 = vrot.slane %v218, 4
        %v298 = vrot.slane %v218, 6
        %v299 = vrot.slane %v219, 2
        %v300 = vrot.slane %v219, 4
        %v301 = vrot.slane %v219, 6
        %v302 = vrot.slane %v220, 2
        %v303 = vrot.slane %v220, 4
        %v304 = vrot.slane %v220, 6
        %v305 = vrot.slane %v221, 2
        %v306 = vrot.slane %v221, 4
        %v307 = vrot.slane %v221, 6
        %v308 = vrot.slane %v222, 2
        %v309 = vrot.slane %v222, 4
        %v310 = vrot.slane %v222, 6
        %v311 = vrot.slane %v223, 2
        %v312 = vrot.slane %v223, 4
        %v313 = vrot.slane %v223, 6
        %v314 = vrot.slane %v224, 2
        %v315 = vrot.slane %v224, 4
        %v316 = vrot.slane %v224, 6
        %v317 = vrot.slane %v225, 2
        %v318 = vrot.slane %v225, 4
        %v319 = vrot.slane %v225, 6
        %v320 = vrot.slane %v226, 2
        %v321 = vrot.slane %v226, 4
        %v322 = vrot.slane %v226, 6
        %v323 = vrot.slane %v227, 2
        %v324 = vrot.slane %v227, 4
        %v325 = vrot.slane %v227, 6
        %v326 = vrot.slane %v228, 2
        %v327 = vrot.slane %v228, 4
        %v328 = vrot.slane %v228, 6
        %v329 = vrot.slane %v229, 2
        %v330 = vrot.slane %v229, 4
        %v331 = vrot.slane %v229, 6
        %v332 = vrot.slane %v230, 2
        %v333 = vrot.slane %v230, 4
        %v334 = vrot.slane %v230, 6
        %v335 = vrot.slane %v231, 2
        %v336 = vrot.slane %v231, 4
        %v337 = vrot.slane %v231, 6
        %v338 = vrot.slane %v232, 2
        %v339 = vrot.slane %v232, 4
        %v340 = vrot.slane %v232, 6
        %v341 = vrot.slane %v233, 2
        %v342 = vrot.slane %v233, 4
        %v343 = vrot.slane %v233, 6
        %v344 = vrot.slane %v234, 2
        %v345 = vrot.slane %v234, 4
        %v346 = vrot.slane %v234, 6
        %v347 = vrot.slane %v235, 2
        %v348 = vrot.slane %v235, 4
        %v349 = vrot.slane %v235, 6
        %v350 = vrot.slane %v236, 2
        %v351 = vrot.slane %v236, 4
        %v352 = vrot.slane %v236, 6
        %v353 = vrot.slane %v237, 2
        %v354 = vrot.slane %v237, 4
        %v355 = vrot.slane %v237, 6
        %v356 = vrot.slane %v238, 2
        %v357 = vrot.slane %v238, 4
        %v358 = vrot.slane %v238, 6
        %v359 = vrot.slane %v239, 2
        %v360 = vrot.slane %v239, 4
        %v361 = vrot.slane %v239, 6
        %v362 = vrot.slane %v240, 2
        %v363 = vrot.slane %v240, 4
        %v364 = vrot.slane %v240, 6
        %v365 = vrot.slane %v241, 2
        %v366 = vrot.slane %v241, 4
        %v367 = vrot.slane %v241, 6
        %v368 = vrot.slane %v242, 2
        %v369 = vrot.slane %v242, 4
        %v370 = vrot.slane %v242, 6
        %v467 = vpack.c.bf16 %v211, %v211
        %v468 = vpack.c.bf16 %v275, %v275
        %v469 = vpack.c.bf16 %v276, %v276
        %v470 = vpack.c.bf16 %v277, %v277
        %v471 = vpack.c.bf16 %v212, %v212
        %v472 = vpack.c.bf16 %v278, %v278
        %v473 = vpack.c.bf16 %v279, %v279
        %v474 = vpack.c.bf16 %v280, %v280
        %v475 = vpack.c.bf16 %v215, %v215
        %v476 = vpack.c.bf16 %v287, %v287
        %v477 = vpack.c.bf16 %v288, %v288
        %v478 = vpack.c.bf16 %v289, %v289
        %v479 = vpack.c.bf16 %v216, %v216
        %v480 = vpack.c.bf16 %v290, %v290
        %v481 = vpack.c.bf16 %v291, %v291
        %v482 = vpack.c.bf16 %v292, %v292
        %v483 = vpack.c.bf16 %v219, %v219
        %v484 = vpack.c.bf16 %v299, %v299
        %v485 = vpack.c.bf16 %v300, %v300
        %v486 = vpack.c.bf16 %v301, %v301
        %v487 = vpack.c.bf16 %v220, %v220
        %v488 = vpack.c.bf16 %v302, %v302
        %v489 = vpack.c.bf16 %v303, %v303
        %v490 = vpack.c.bf16 %v304, %v304
        %v491 = vpack.c.bf16 %v223, %v223
        %v492 = vpack.c.bf16 %v311, %v311
        %v493 = vpack.c.bf16 %v312, %v312
        %v494 = vpack.c.bf16 %v313, %v313
        %v495 = vpack.c.bf16 %v224, %v224
        %v496 = vpack.c.bf16 %v314, %v314
        %v497 = vpack.c.bf16 %v315, %v315
        %v498 = vpack.c.bf16 %v316, %v316
        %v499 = vpack.c.bf16 %v227, %v227
        %v500 = vpack.c.bf16 %v323, %v323
        %v501 = vpack.c.bf16 %v324, %v324
        %v502 = vpack.c.bf16 %v325, %v325
        %v503 = vpack.c.bf16 %v228, %v228
        %v504 = vpack.c.bf16 %v326, %v326
        %v505 = vpack.c.bf16 %v327, %v327
        %v506 = vpack.c.bf16 %v328, %v328
        %v507 = vpack.c.bf16 %v231, %v231
        %v508 = vpack.c.bf16 %v335, %v335
        %v509 = vpack.c.bf16 %v336, %v336
        %v510 = vpack.c.bf16 %v337, %v337
        %v511 = vpack.c.bf16 %v232, %v232
        %v512 = vpack.c.bf16 %v338, %v338
        %v513 = vpack.c.bf16 %v339, %v339
        %v514 = vpack.c.bf16 %v340, %v340
        %v515 = vpack.c.bf16 %v235, %v235
        %v516 = vpack.c.bf16 %v347, %v347
        %v517 = vpack.c.bf16 %v348, %v348
        %v518 = vpack.c.bf16 %v349, %v349
        %v519 = vpack.c.bf16 %v236, %v236
        %v520 = vpack.c.bf16 %v350, %v350
        %v521 = vpack.c.bf16 %v351, %v351
        %v522 = vpack.c.bf16 %v352, %v352
        %v523 = vpack.c.bf16 %v239, %v239
        %v524 = vpack.c.bf16 %v359, %v359
        %v525 = vpack.c.bf16 %v360, %v360
        %v526 = vpack.c.bf16 %v361, %v361
        %v527 = vpack.c.bf16 %v240, %v240
        %v528 = vpack.c.bf16 %v362, %v362
        %v529 = vpack.c.bf16 %v363, %v363
        %v530 = vpack.c.bf16 %v364, %v364
        %v531 = vld [vmem:[#allocation4] sm:$0xf]
        %v532 = vld [vmem:[#allocation4 + $0x4] sm:$0xf]
        %v533 = vld [vmem:[#allocation4 + $0x8] sm:$0xf]
        %v534 = vld [vmem:[#allocation4 + $0xc] sm:$0xf]
        %v599 = vunpack.c.l.b16 %v467
        %v600 = vunpack.c.l.b16 %v468
        %v601 = vunpack.c.l.b16 %v469
        %v602 = vunpack.c.l.b16 %v470
        %v603 = vunpack.c.l.b16 %v471
        %v604 = vunpack.c.l.b16 %v472
        %v605 = vunpack.c.l.b16 %v473
        %v606 = vunpack.c.l.b16 %v474
        %v607 = vunpack.c.l.b16 %v475
        %v608 = vunpack.c.l.b16 %v476
        %v609 = vunpack.c.l.b16 %v477
        %v610 = vunpack.c.l.b16 %v478
        %v611 = vunpack.c.l.b16 %v479
        %v612 = vunpack.c.l.b16 %v480
        %v613 = vunpack.c.l.b16 %v481
        %v614 = vunpack.c.l.b16 %v482
        %v615 = vunpack.c.l.b16 %v483
        %v616 = vunpack.c.l.b16 %v484
        %v617 = vunpack.c.l.b16 %v485
        %v618 = vunpack.c.l.b16 %v486
        %v619 = vunpack.c.l.b16 %v487
        %v620 = vunpack.c.l.b16 %v488
        %v621 = vunpack.c.l.b16 %v489
        %v622 = vunpack.c.l.b16 %v490
        %v623 = vunpack.c.l.b16 %v491
        %v624 = vunpack.c.l.b16 %v492
        %v625 = vunpack.c.l.b16 %v493
        %v626 = vunpack.c.l.b16 %v494
        %v627 = vunpack.c.l.b16 %v495
        %v628 = vunpack.c.l.b16 %v496
        %v629 = vunpack.c.l.b16 %v497
        %v630 = vunpack.c.l.b16 %v498
        %v631 = vunpack.c.l.b16 %v499
        %v632 = vunpack.c.l.b16 %v500
        %v633 = vunpack.c.l.b16 %v501
        %v634 = vunpack.c.l.b16 %v502
        %v635 = vunpack.c.l.b16 %v503
        %v636 = vunpack.c.l.b16 %v504
        %v637 = vunpack.c.l.b16 %v505
        %v638 = vunpack.c.l.b16 %v506
        %v639 = vunpack.c.l.b16 %v507
        %v640 = vunpack.c.l.b16 %v508
        %v641 = vunpack.c.l.b16 %v509
        %v642 = vunpack.c.l.b16 %v510
        %v643 = vunpack.c.l.b16 %v511
        %v644 = vunpack.c.l.b16 %v512
        %v645 = vunpack.c.l.b16 %v513
        %v646 = vunpack.c.l.b16 %v514
        %v647 = vunpack.c.l.b16 %v515
        %v648 = vunpack.c.l.b16 %v516
        %v649 = vunpack.c.l.b16 %v517
        %v650 = vunpack.c.l.b16 %v518
        %v651 = vunpack.c.l.b16 %v519
        %v652 = vunpack.c.l.b16 %v520
        %v653 = vunpack.c.l.b16 %v521
        %v654 = vunpack.c.l.b16 %v522
        %v655 = vunpack.c.l.b16 %v523
        %v656 = vunpack.c.l.b16 %v524
        %v657 = vunpack.c.l.b16 %v525
        %v658 = vunpack.c.l.b16 %v526
        %v659 = vunpack.c.l.b16 %v527
        %v660 = vunpack.c.l.b16 %v528
        %v661 = vunpack.c.l.b16 %v529
        %v662 = vunpack.c.l.b16 %v530
        %v663 = vrot.slane %v600, 7
        %vm664 = vcmask 1041409
        %v665 = vsel %vm664, %v663, %v599
        %v666 = vrot.slane %v601, 6
        %vm667 = vcmask 1042434
        %v668 = vsel %vm667, %v666, %v665
        %v669 = vrot.slane %v602, 5
        %vm670 = vcmask 1043459
        %v671 = vsel %vm670, %v669, %v668
        %v672 = vrot.slane %v603, 4
        %vm673 = vcmask 1044484
        %v674 = vsel %vm673, %v672, %v671
        %v675 = vrot.slane %v604, 3
        %vm676 = vcmask 1045509
        %v677 = vsel %vm676, %v675, %v674
        %v678 = vrot.slane %v605, 2
        %vm679 = vcmask 1046534
        %v680 = vsel %vm679, %v678, %v677
        %v681 = vrot.slane %v606, 1
        %vm682 = vcmask 1047559
        %v683 = vsel %vm682, %v681, %v680
        %v684 = vrot.slane %v608, 7
        %v685 = vsel %vm664, %v684, %v607
        %v686 = vrot.slane %v609, 6
        %v687 = vsel %vm667, %v686, %v685
        %v688 = vrot.slane %v610, 5
        %v689 = vsel %vm670, %v688, %v687
        %v690 = vrot.slane %v611, 4
        %v691 = vsel %vm673, %v690, %v689
        %v692 = vrot.slane %v612, 3
        %v693 = vsel %vm676, %v692, %v691
        %v694 = vrot.slane %v613, 2
        %v695 = vsel %vm679, %v694, %v693
        %v696 = vrot.slane %v614, 1
        %v697 = vsel %vm682, %v696, %v695
        %v698 = vrot.slane %v616, 7
        %v699 = vsel %vm664, %v698, %v615
        %v700 = vrot.slane %v617, 6
        %v701 = vsel %vm667, %v700, %v699
        %v702 = vrot.slane %v618, 5
        %v703 = vsel %vm670, %v702, %v701
        %v704 = vrot.slane %v619, 4
        %v705 = vsel %vm673, %v704, %v703
        %v706 = vrot.slane %v620, 3
        %v707 = vsel %vm676, %v706, %v705
        %v708 = vrot.slane %v621, 2
        %v709 = vsel %vm679, %v708, %v707
        %v710 = vrot.slane %v622, 1
        %v711 = vsel %vm682, %v710, %v709
        %v712 = vrot.slane %v624, 7
        %v713 = vsel %vm664, %v712, %v623
        %v714 = vrot.slane %v625, 6
        %v715 = vsel %vm667, %v714, %v713
        %v716 = vrot.slane %v626, 5
        %v717 = vsel %vm670, %v716, %v715
        %v718 = vrot.slane %v627, 4
        %v719 = vsel %vm673, %v718, %v717
        %v720 = vrot.slane %v628, 3
        %v721 = vsel %vm676, %v720, %v719
        %v722 = vrot.slane %v629, 2
        %v723 = vsel %vm679, %v722, %v721
        %v724 = vrot.slane %v630, 1
        %v725 = vsel %vm682, %v724, %v723
        %v726 = vrot.slane %v632, 7
        %v727 = vsel %vm664, %v726, %v631
        %v728 = vrot.slane %v633, 6
        %v729 = vsel %vm667, %v728, %v727
        %v730 = vrot.slane %v634, 5
        %v731 = vsel %vm670, %v730, %v729
        %v732 = vrot.slane %v635, 4
        %v733 = vsel %vm673, %v732, %v731
        %v734 = vrot.slane %v636, 3
        %v735 = vsel %vm676, %v734, %v733
        %v736 = vrot.slane %v637, 2
        %v737 = vsel %vm679, %v736, %v735
        %v738 = vrot.slane %v638, 1
        %v739 = vsel %vm682, %v738, %v737
        %v740 = vrot.slane %v640, 7
        %v741 = vsel %vm664, %v740, %v639
        %v742 = vrot.slane %v641, 6
        %v743 = vsel %vm667, %v742, %v741
        %v744 = vrot.slane %v642, 5
        %v745 = vsel %vm670, %v744, %v743
        %v746 = vrot.slane %v643, 4
        %v747 = vsel %vm673, %v746, %v745
        %v748 = vrot.slane %v644, 3
        %v749 = vsel %vm676, %v748, %v747
        %v750 = vrot.slane %v645, 2
        %v751 = vsel %vm679, %v750, %v749
        %v752 = vrot.slane %v646, 1
        %v753 = vsel %vm682, %v752, %v751
        %v754 = vrot.slane %v648, 7
        %v755 = vsel %vm664, %v754, %v647
        %v756 = vrot.slane %v649, 6
        %v757 = vsel %vm667, %v756, %v755
        %v758 = vrot.slane %v650, 5
        %v759 = vsel %vm670, %v758, %v757
        %v760 = vrot.slane %v651, 4
        %v761 = vsel %vm673, %v760, %v759
        %v762 = vrot.slane %v652, 3
        %v763 = vsel %vm676, %v762, %v761
        %v764 = vrot.slane %v653, 2
        %v765 = vsel %vm679, %v764, %v763
        %v766 = vrot.slane %v654, 1
        %v767 = vsel %vm682, %v766, %v765
        %v768 = vrot.slane %v656, 7
        %v769 = vsel %vm664, %v768, %v655
        %v770 = vrot.slane %v657, 6
        %v771 = vsel %vm667, %v770, %v769
        %v772 = vrot.slane %v658, 5
        %v773 = vsel %vm670, %v772, %v771
        %v774 = vrot.slane %v659, 4
        %v775 = vsel %vm673, %v774, %v773
        %v776 = vrot.slane %v660, 3
        %v777 = vsel %vm676, %v776, %v775
        %v778 = vrot.slane %v661, 2
        %v779 = vsel %vm679, %v778, %v777
        %v780 = vrot.slane %v662, 1
        %v781 = vsel %vm682, %v780, %v779
        %v782 = vpack.c.b16 %v697, %v683
        %v783 = vpack.c.b16 %v725, %v711
        %v784 = vpack.c.b16 %v753, %v739
        %v785 = vpack.c.b16 %v781, %v767
        %v790 = vunpack.c.l.b16 %v531
        %v791 = vunpack.c.l.b16 %v532
        %v792 = vunpack.c.l.b16 %v533
        %v793 = vunpack.c.l.b16 %v534
        %v794 = vpack.c.b16 %v791, %v790
        %v795 = vpack.c.b16 %v793, %v792
        %vm798 = vcmask 261120
        %v800 = vsel %vm798, %v782, 0
        %v803 = vsel %vm798, %v783, 0
        %v806 = vsel %vm798, %v784, 0
        %v809 = vsel %vm798, %v785, 0
        %811 = vmatpush.bf16.msra.mxu0 0
        %812 = vmatpush.bf16.msra.mxu0 0
        %813 = vmatpush.bf16.msra.mxu0 0
        %814 = vmatpush.bf16.msra.mxu0 0
        %815 = vmatpush.bf16.msra.mxu0 0
        %816 = vmatpush.bf16.msra.mxu0 0
        %817 = vmatpush.bf16.msra.mxu0 %v795
        %818 = vmatpush.bf16.msra.mxu0 %v794
        %819 = vmatmul.bf16.gmra.mxu0 %v800
        %v820 = vpop.f32.mrf.mxu0
        %v821 = vadd.f32 0.0, %v820
        %v822 = vpop.f32.mrf.mxu0
        %v823 = vadd.f32 0.0, %v822
        %824 = vmatmul.bf16.gmra.mxu0 %v803
        %v825 = vpop.f32.mrf.mxu0
        %v826 = vadd.f32 0.0, %v825
        %v827 = vpop.f32.mrf.mxu0
        %v828 = vadd.f32 0.0, %v827
        %829 = vmatmul.bf16.gmra.mxu0 %v806
        %v830 = vpop.f32.mrf.mxu0
        %v831 = vadd.f32 0.0, %v830
        %v832 = vpop.f32.mrf.mxu0
        %v833 = vadd.f32 0.0, %v832
        %834 = vmatmul.bf16.gmra.mxu0 %v809
        %v835 = vpop.f32.mrf.mxu0
        %v836 = vadd.f32 0.0, %v835
        %v837 = vpop.f32.mrf.mxu0
        %v838 = vadd.f32 0.0, %v837
        %839 = vdwg.mxu0
        %v840 = vrot.slane %v599, 1
        %v841 = vsel %vm664, %v600, %v840
        %v842 = vrot.slane %v601, 7
        %v843 = vsel %vm667, %v842, %v841
        %v844 = vrot.slane %v602, 6
        %v845 = vsel %vm670, %v844, %v843
        %v846 = vrot.slane %v603, 5
        %v847 = vsel %vm673, %v846, %v845
        %v848 = vrot.slane %v604, 4
        %v849 = vsel %vm676, %v848, %v847
        %v850 = vrot.slane %v605, 3
        %v851 = vsel %vm679, %v850, %v849
        %v852 = vrot.slane %v606, 2
        %v853 = vsel %vm682, %v852, %v851
        %v854 = vrot.slane %v607, 1
        %v855 = vsel %vm664, %v608, %v854
        %v856 = vrot.slane %v609, 7
        %v857 = vsel %vm667, %v856, %v855
        %v858 = vrot.slane %v610, 6
        %v859 = vsel %vm670, %v858, %v857
        %v860 = vrot.slane %v611, 5
        %v861 = vsel %vm673, %v860, %v859
        %v862 = vrot.slane %v612, 4
        %v863 = vsel %vm676, %v862, %v861
        %v864 = vrot.slane %v613, 3
        %v865 = vsel %vm679, %v864, %v863
        %v866 = vrot.slane %v614, 2
        %v867 = vsel %vm682, %v866, %v865
        %v868 = vrot.slane %v615, 1
        %v869 = vsel %vm664, %v616, %v868
        %v870 = vrot.slane %v617, 7
        %v871 = vsel %vm667, %v870, %v869
        %v872 = vrot.slane %v618, 6
        %v873 = vsel %vm670, %v872, %v871
        %v874 = vrot.slane %v619, 5
        %v875 = vsel %vm673, %v874, %v873
        %v876 = vrot.slane %v620, 4
        %v877 = vsel %vm676, %v876, %v875
        %v878 = vrot.slane %v621, 3
        %v879 = vsel %vm679, %v878, %v877
        %v880 = vrot.slane %v622, 2
        %v881 = vsel %vm682, %v880, %v879
        %v882 = vrot.slane %v623, 1
        %v883 = vsel %vm664, %v624, %v882
        %v884 = vrot.slane %v625, 7
        %v885 = vsel %vm667, %v884, %v883
        %v886 = vrot.slane %v626, 6
        %v887 = vsel %vm670, %v886, %v885
        %v888 = vrot.slane %v627, 5
        %v889 = vsel %vm673, %v888, %v887
        %v890 = vrot.slane %v628, 4
        %v891 = vsel %vm676, %v890, %v889
        %v892 = vrot.slane %v629, 3
        %v893 = vsel %vm679, %v892, %v891
        %v894 = vrot.slane %v630, 2
        %v895 = vsel %vm682, %v894, %v893
        %v896 = vrot.slane %v631, 1
        %v897 = vsel %vm664, %v632, %v896
        %v898 = vrot.slane %v633, 7
        %v899 = vsel %vm667, %v898, %v897
        %v900 = vrot.slane %v634, 6
        %v901 = vsel %vm670, %v900, %v899
        %v902 = vrot.slane %v635, 5
        %v903 = vsel %vm673, %v902, %v901
        %v904 = vrot.slane %v636, 4
        %v905 = vsel %vm676, %v904, %v903
        %v906 = vrot.slane %v637, 3
        %v907 = vsel %vm679, %v906, %v905
        %v908 = vrot.slane %v638, 2
        %v909 = vsel %vm682, %v908, %v907
        %v910 = vrot.slane %v639, 1
        %v911 = vsel %vm664, %v640, %v910
        %v912 = vrot.slane %v641, 7
        %v913 = vsel %vm667, %v912, %v911
        %v914 = vrot.slane %v642, 6
        %v915 = vsel %vm670, %v914, %v913
        %v916 = vrot.slane %v643, 5
        %v917 = vsel %vm673, %v916, %v915
        %v918 = vrot.slane %v644, 4
        %v919 = vsel %vm676, %v918, %v917
        %v920 = vrot.slane %v645, 3
        %v921 = vsel %vm679, %v920, %v919
        %v922 = vrot.slane %v646, 2
        %v923 = vsel %vm682, %v922, %v921
        %v924 = vrot.slane %v647, 1
        %v925 = vsel %vm664, %v648, %v924
        %v926 = vrot.slane %v649, 7
        %v927 = vsel %vm667, %v926, %v925
        %v928 = vrot.slane %v650, 6
        %v929 = vsel %vm670, %v928, %v927
        %v930 = vrot.slane %v651, 5
        %v931 = vsel %vm673, %v930, %v929
        %v932 = vrot.slane %v652, 4
        %v933 = vsel %vm676, %v932, %v931
        %v934 = vrot.slane %v653, 3
        %v935 = vsel %vm679, %v934, %v933
        %v936 = vrot.slane %v654, 2
        %v937 = vsel %vm682, %v936, %v935
        %v938 = vrot.slane %v655, 1
        %v939 = vsel %vm664, %v656, %v938
        %v940 = vrot.slane %v657, 7
        %v941 = vsel %vm667, %v940, %v939
        %v942 = vrot.slane %v658, 6
        %v943 = vsel %vm670, %v942, %v941
        %v944 = vrot.slane %v659, 5
        %v945 = vsel %vm673, %v944, %v943
        %v946 = vrot.slane %v660, 4
        %v947 = vsel %vm676, %v946, %v945
        %v948 = vrot.slane %v661, 3
        %v949 = vsel %vm679, %v948, %v947
        %v950 = vrot.slane %v662, 2
        %v951 = vsel %vm682, %v950, %v949
        %v952 = vpack.c.b16 %v867, %v853
        %v953 = vpack.c.b16 %v895, %v881
        %v954 = vpack.c.b16 %v923, %v909
        %v955 = vpack.c.b16 %v951, %v937
        %v957 = vsel %vm798, %v952, 0
        %v960 = vsel %vm798, %v953, 0
        %v963 = vsel %vm798, %v954, 0
        %v966 = vsel %vm798, %v955, 0
        %968 = vmatpush.bf16.msra.mxu0 0
        %969 = vmatpush.bf16.msra.mxu0 0
        %970 = vmatpush.bf16.msra.mxu0 0
        %971 = vmatpush.bf16.msra.mxu0 0
        %972 = vmatpush.bf16.msra.mxu0 0
        %973 = vmatpush.bf16.msra.mxu0 0
        %974 = vmatpush.bf16.msra.mxu0 %v795
        %975 = vmatpush.bf16.msra.mxu0 %v794
        %976 = vmatmul.bf16.gmra.mxu0 %v957
        %v977 = vpop.f32.mrf.mxu0
        %v978 = vadd.f32 0.0, %v977
        %v979 = vpop.f32.mrf.mxu0
        %v980 = vadd.f32 0.0, %v979
        %981 = vmatmul.bf16.gmra.mxu0 %v960
        %v982 = vpop.f32.mrf.mxu0
        %v983 = vadd.f32 0.0, %v982
        %v984 = vpop.f32.mrf.mxu0
        %v985 = vadd.f32 0.0, %v984
        %986 = vmatmul.bf16.gmra.mxu0 %v963
        %v987 = vpop.f32.mrf.mxu0
        %v988 = vadd.f32 0.0, %v987
        %v989 = vpop.f32.mrf.mxu0
        %v990 = vadd.f32 0.0, %v989
        %991 = vmatmul.bf16.gmra.mxu0 %v966
        %v992 = vpop.f32.mrf.mxu0
        %v993 = vadd.f32 0.0, %v992
        %v994 = vpop.f32.mrf.mxu0
        %v995 = vadd.f32 0.0, %v994
        %996 = vdwg.mxu0
        %v997 = vmax.f32 %v821, %v978
        %v998 = vmax.f32 %v823, %v980
        %v999 = vmax.f32 %v826, %v983
        %v1000 = vmax.f32 %v828, %v985
        %v1001 = vmax.f32 %v831, %v988
        %v1002 = vmax.f32 %v833, %v990
        %v1003 = vmax.f32 %v836, %v993
        %v1004 = vmax.f32 %v838, %v995
        %v1005 = vpack.c.bf16 %v213, %v213
        %v1006 = vpack.c.bf16 %v281, %v281
        %v1007 = vpack.c.bf16 %v282, %v282
        %v1008 = vpack.c.bf16 %v283, %v283
        %v1009 = vpack.c.bf16 %v214, %v214
        %v1010 = vpack.c.bf16 %v284, %v284
        %v1011 = vpack.c.bf16 %v285, %v285
        %v1012 = vpack.c.bf16 %v286, %v286
        %v1013 = vpack.c.bf16 %v217, %v217
        %v1014 = vpack.c.bf16 %v293, %v293
        %v1015 = vpack.c.bf16 %v294, %v294
        %v1016 = vpack.c.bf16 %v295, %v295
        %v1017 = vpack.c.bf16 %v218, %v218
        %v1018 = vpack.c.bf16 %v296, %v296
        %v1019 = vpack.c.bf16 %v297, %v297
        %v1020 = vpack.c.bf16 %v298, %v298
        %v1021 = vpack.c.bf16 %v221, %v221
        %v1022 = vpack.c.bf16 %v305, %v305
        %v1023 = vpack.c.bf16 %v306, %v306
        %v1024 = vpack.c.bf16 %v307, %v307
        %v1025 = vpack.c.bf16 %v222, %v222
        %v1026 = vpack.c.bf16 %v308, %v308
        %v1027 = vpack.c.bf16 %v309, %v309
        %v1028 = vpack.c.bf16 %v310, %v310
        %v1029 = vpack.c.bf16 %v225, %v225
        %v1030 = vpack.c.bf16 %v317, %v317
        %v1031 = vpack.c.bf16 %v318, %v318
        %v1032 = vpack.c.bf16 %v319, %v319
        %v1033 = vpack.c.bf16 %v226, %v226
        %v1034 = vpack.c.bf16 %v320, %v320
        %v1035 = vpack.c.bf16 %v321, %v321
        %v1036 = vpack.c.bf16 %v322, %v322
        %v1037 = vpack.c.bf16 %v229, %v229
        %v1038 = vpack.c.bf16 %v329, %v329
        %v1039 = vpack.c.bf16 %v330, %v330
        %v1040 = vpack.c.bf16 %v331, %v331
        %v1041 = vpack.c.bf16 %v230, %v230
        %v1042 = vpack.c.bf16 %v332, %v332
        %v1043 = vpack.c.bf16 %v333, %v333
        %v1044 = vpack.c.bf16 %v334, %v334
        %v1045 = vpack.c.bf16 %v233, %v233
        %v1046 = vpack.c.bf16 %v341, %v341
        %v1047 = vpack.c.bf16 %v342, %v342
        %v1048 = vpack.c.bf16 %v343, %v343
        %v1049 = vpack.c.bf16 %v234, %v234
        %v1050 = vpack.c.bf16 %v344, %v344
        %v1051 = vpack.c.bf16 %v345, %v345
        %v1052 = vpack.c.bf16 %v346, %v346
        %v1053 = vpack.c.bf16 %v237, %v237
        %v1054 = vpack.c.bf16 %v353, %v353
        %v1055 = vpack.c.bf16 %v354, %v354
        %v1056 = vpack.c.bf16 %v355, %v355
        %v1057 = vpack.c.bf16 %v238, %v238
        %v1058 = vpack.c.bf16 %v356, %v356
        %v1059 = vpack.c.bf16 %v357, %v357
        %v1060 = vpack.c.bf16 %v358, %v358
        %v1061 = vpack.c.bf16 %v241, %v241
        %v1062 = vpack.c.bf16 %v365, %v365
        %v1063 = vpack.c.bf16 %v366, %v366
        %v1064 = vpack.c.bf16 %v367, %v367
        %v1065 = vpack.c.bf16 %v242, %v242
        %v1066 = vpack.c.bf16 %v368, %v368
        %v1067 = vpack.c.bf16 %v369, %v369
        %v1068 = vpack.c.bf16 %v370, %v370
        %v1133 = vunpack.c.l.b16 %v1005
        %v1134 = vunpack.c.l.b16 %v1006
        %v1135 = vunpack.c.l.b16 %v1007
        %v1136 = vunpack.c.l.b16 %v1008
        %v1137 = vunpack.c.l.b16 %v1009
        %v1138 = vunpack.c.l.b16 %v1010
        %v1139 = vunpack.c.l.b16 %v1011
        %v1140 = vunpack.c.l.b16 %v1012
        %v1141 = vunpack.c.l.b16 %v1013
        %v1142 = vunpack.c.l.b16 %v1014
        %v1143 = vunpack.c.l.b16 %v1015
        %v1144 = vunpack.c.l.b16 %v1016
        %v1145 = vunpack.c.l.b16 %v1017
        %v1146 = vunpack.c.l.b16 %v1018
        %v1147 = vunpack.c.l.b16 %v1019
        %v1148 = vunpack.c.l.b16 %v1020
        %v1149 = vunpack.c.l.b16 %v1021
        %v1150 = vunpack.c.l.b16 %v1022
        %v1151 = vunpack.c.l.b16 %v1023
        %v1152 = vunpack.c.l.b16 %v1024
        %v1153 = vunpack.c.l.b16 %v1025
        %v1154 = vunpack.c.l.b16 %v1026
        %v1155 = vunpack.c.l.b16 %v1027
        %v1156 = vunpack.c.l.b16 %v1028
        %v1157 = vunpack.c.l.b16 %v1029
        %v1158 = vunpack.c.l.b16 %v1030
        %v1159 = vunpack.c.l.b16 %v1031
        %v1160 = vunpack.c.l.b16 %v1032
        %v1161 = vunpack.c.l.b16 %v1033
        %v1162 = vunpack.c.l.b16 %v1034
        %v1163 = vunpack.c.l.b16 %v1035
        %v1164 = vunpack.c.l.b16 %v1036
        %v1165 = vunpack.c.l.b16 %v1037
        %v1166 = vunpack.c.l.b16 %v1038
        %v1167 = vunpack.c.l.b16 %v1039
        %v1168 = vunpack.c.l.b16 %v1040
        %v1169 = vunpack.c.l.b16 %v1041
        %v1170 = vunpack.c.l.b16 %v1042
        %v1171 = vunpack.c.l.b16 %v1043
        %v1172 = vunpack.c.l.b16 %v1044
        %v1173 = vunpack.c.l.b16 %v1045
        %v1174 = vunpack.c.l.b16 %v1046
        %v1175 = vunpack.c.l.b16 %v1047
        %v1176 = vunpack.c.l.b16 %v1048
        %v1177 = vunpack.c.l.b16 %v1049
        %v1178 = vunpack.c.l.b16 %v1050
        %v1179 = vunpack.c.l.b16 %v1051
        %v1180 = vunpack.c.l.b16 %v1052
        %v1181 = vunpack.c.l.b16 %v1053
        %v1182 = vunpack.c.l.b16 %v1054
        %v1183 = vunpack.c.l.b16 %v1055
        %v1184 = vunpack.c.l.b16 %v1056
        %v1185 = vunpack.c.l.b16 %v1057
        %v1186 = vunpack.c.l.b16 %v1058
        %v1187 = vunpack.c.l.b16 %v1059
        %v1188 = vunpack.c.l.b16 %v1060
        %v1189 = vunpack.c.l.b16 %v1061
        %v1190 = vunpack.c.l.b16 %v1062
        %v1191 = vunpack.c.l.b16 %v1063
        %v1192 = vunpack.c.l.b16 %v1064
        %v1193 = vunpack.c.l.b16 %v1065
        %v1194 = vunpack.c.l.b16 %v1066
        %v1195 = vunpack.c.l.b16 %v1067
        %v1196 = vunpack.c.l.b16 %v1068
        %v1197 = vrot.slane %v1134, 7
        %v1198 = vsel %vm664, %v1197, %v1133
        %v1199 = vrot.slane %v1135, 6
        %v1200 = vsel %vm667, %v1199, %v1198
        %v1201 = vrot.slane %v1136, 5
        %v1202 = vsel %vm670, %v1201, %v1200
        %v1203 = vrot.slane %v1137, 4
        %v1204 = vsel %vm673, %v1203, %v1202
        %v1205 = vrot.slane %v1138, 3
        %v1206 = vsel %vm676, %v1205, %v1204
        %v1207 = vrot.slane %v1139, 2
        %v1208 = vsel %vm679, %v1207, %v1206
        %v1209 = vrot.slane %v1140, 1
        %v1210 = vsel %vm682, %v1209, %v1208
        %v1211 = vrot.slane %v1142, 7
        %v1212 = vsel %vm664, %v1211, %v1141
        %v1213 = vrot.slane %v1143, 6
        %v1214 = vsel %vm667, %v1213, %v1212
        %v1215 = vrot.slane %v1144, 5
        %v1216 = vsel %vm670, %v1215, %v1214
        %v1217 = vrot.slane %v1145, 4
        %v1218 = vsel %vm673, %v1217, %v1216
        %v1219 = vrot.slane %v1146, 3
        %v1220 = vsel %vm676, %v1219, %v1218
        %v1221 = vrot.slane %v1147, 2
        %v1222 = vsel %vm679, %v1221, %v1220
        %v1223 = vrot.slane %v1148, 1
        %v1224 = vsel %vm682, %v1223, %v1222
        %v1225 = vrot.slane %v1150, 7
        %v1226 = vsel %vm664, %v1225, %v1149
        %v1227 = vrot.slane %v1151, 6
        %v1228 = vsel %vm667, %v1227, %v1226
        %v1229 = vrot.slane %v1152, 5
        %v1230 = vsel %vm670, %v1229, %v1228
        %v1231 = vrot.slane %v1153, 4
        %v1232 = vsel %vm673, %v1231, %v1230
        %v1233 = vrot.slane %v1154, 3
        %v1234 = vsel %vm676, %v1233, %v1232
        %v1235 = vrot.slane %v1155, 2
        %v1236 = vsel %vm679, %v1235, %v1234
        %v1237 = vrot.slane %v1156, 1
        %v1238 = vsel %vm682, %v1237, %v1236
        %v1239 = vrot.slane %v1158, 7
        %v1240 = vsel %vm664, %v1239, %v1157
        %v1241 = vrot.slane %v1159, 6
        %v1242 = vsel %vm667, %v1241, %v1240
        %v1243 = vrot.slane %v1160, 5
        %v1244 = vsel %vm670, %v1243, %v1242
        %v1245 = vrot.slane %v1161, 4
        %v1246 = vsel %vm673, %v1245, %v1244
        %v1247 = vrot.slane %v1162, 3
        %v1248 = vsel %vm676, %v1247, %v1246
        %v1249 = vrot.slane %v1163, 2
        %v1250 = vsel %vm679, %v1249, %v1248
        %v1251 = vrot.slane %v1164, 1
        %v1252 = vsel %vm682, %v1251, %v1250
        %v1253 = vrot.slane %v1166, 7
        %v1254 = vsel %vm664, %v1253, %v1165
        %v1255 = vrot.slane %v1167, 6
        %v1256 = vsel %vm667, %v1255, %v1254
        %v1257 = vrot.slane %v1168, 5
        %v1258 = vsel %vm670, %v1257, %v1256
        %v1259 = vrot.slane %v1169, 4
        %v1260 = vsel %vm673, %v1259, %v1258
        %v1261 = vrot.slane %v1170, 3
        %v1262 = vsel %vm676, %v1261, %v1260
        %v1263 = vrot.slane %v1171, 2
        %v1264 = vsel %vm679, %v1263, %v1262
        %v1265 = vrot.slane %v1172, 1
        %v1266 = vsel %vm682, %v1265, %v1264
        %v1267 = vrot.slane %v1174, 7
        %v1268 = vsel %vm664, %v1267, %v1173
        %v1269 = vrot.slane %v1175, 6
        %v1270 = vsel %vm667, %v1269, %v1268
        %v1271 = vrot.slane %v1176, 5
        %v1272 = vsel %vm670, %v1271, %v1270
        %v1273 = vrot.slane %v1177, 4
        %v1274 = vsel %vm673, %v1273, %v1272
        %v1275 = vrot.slane %v1178, 3
        %v1276 = vsel %vm676, %v1275, %v1274
        %v1277 = vrot.slane %v1179, 2
        %v1278 = vsel %vm679, %v1277, %v1276
        %v1279 = vrot.slane %v1180, 1
        %v1280 = vsel %vm682, %v1279, %v1278
        %v1281 = vrot.slane %v1182, 7
        %v1282 = vsel %vm664, %v1281, %v1181
        %v1283 = vrot.slane %v1183, 6
        %v1284 = vsel %vm667, %v1283, %v1282
        %v1285 = vrot.slane %v1184, 5
        %v1286 = vsel %vm670, %v1285, %v1284
        %v1287 = vrot.slane %v1185, 4
        %v1288 = vsel %vm673, %v1287, %v1286
        %v1289 = vrot.slane %v1186, 3
        %v1290 = vsel %vm676, %v1289, %v1288
        %v1291 = vrot.slane %v1187, 2
        %v1292 = vsel %vm679, %v1291, %v1290
        %v1293 = vrot.slane %v1188, 1
        %v1294 = vsel %vm682, %v1293, %v1292
        %v1295 = vrot.slane %v1190, 7
        %v1296 = vsel %vm664, %v1295, %v1189
        %v1297 = vrot.slane %v1191, 6
        %v1298 = vsel %vm667, %v1297, %v1296
        %v1299 = vrot.slane %v1192, 5
        %v1300 = vsel %vm670, %v1299, %v1298
        %v1301 = vrot.slane %v1193, 4
        %v1302 = vsel %vm673, %v1301, %v1300
        %v1303 = vrot.slane %v1194, 3
        %v1304 = vsel %vm676, %v1303, %v1302
        %v1305 = vrot.slane %v1195, 2
        %v1306 = vsel %vm679, %v1305, %v1304
        %v1307 = vrot.slane %v1196, 1
        %v1308 = vsel %vm682, %v1307, %v1306
        %v1309 = vpack.c.b16 %v1224, %v1210
        %v1310 = vpack.c.b16 %v1252, %v1238
        %v1311 = vpack.c.b16 %v1280, %v1266
        %v1312 = vpack.c.b16 %v1308, %v1294
        %v1314 = vsel %vm798, %v1309, 0
        %v1317 = vsel %vm798, %v1310, 0
        %v1320 = vsel %vm798, %v1311, 0
        %v1323 = vsel %vm798, %v1312, 0
        %1325 = vmatpush.bf16.msra.mxu0 0
        %1326 = vmatpush.bf16.msra.mxu0 0
        %1327 = vmatpush.bf16.msra.mxu0 0
        %1328 = vmatpush.bf16.msra.mxu0 0
        %1329 = vmatpush.bf16.msra.mxu0 0
        %1330 = vmatpush.bf16.msra.mxu0 0
        %1331 = vmatpush.bf16.msra.mxu0 %v795
        %1332 = vmatpush.bf16.msra.mxu0 %v794
        %1333 = vmatmul.bf16.gmra.mxu0 %v1314
        %v1334 = vpop.f32.mrf.mxu0
        %v1335 = vadd.f32 0.0, %v1334
        %v1336 = vpop.f32.mrf.mxu0
        %v1337 = vadd.f32 0.0, %v1336
        %1338 = vmatmul.bf16.gmra.mxu0 %v1317
        %v1339 = vpop.f32.mrf.mxu0
        %v1340 = vadd.f32 0.0, %v1339
        %v1341 = vpop.f32.mrf.mxu0
        %v1342 = vadd.f32 0.0, %v1341
        %1343 = vmatmul.bf16.gmra.mxu0 %v1320
        %v1344 = vpop.f32.mrf.mxu0
        %v1345 = vadd.f32 0.0, %v1344
        %v1346 = vpop.f32.mrf.mxu0
        %v1347 = vadd.f32 0.0, %v1346
        %1348 = vmatmul.bf16.gmra.mxu0 %v1323
        %v1349 = vpop.f32.mrf.mxu0
        %v1350 = vadd.f32 0.0, %v1349
        %v1351 = vpop.f32.mrf.mxu0
        %v1352 = vadd.f32 0.0, %v1351
        %1353 = vdwg.mxu0
        %v1354 = vmax.f32 %v997, %v1335
        %v1355 = vmax.f32 %v998, %v1337
        %v1356 = vmax.f32 %v999, %v1340
        %v1357 = vmax.f32 %v1000, %v1342
        %v1358 = vmax.f32 %v1001, %v1345
        %v1359 = vmax.f32 %v1002, %v1347
        %v1360 = vmax.f32 %v1003, %v1350
        %v1361 = vmax.f32 %v1004, %v1352
        %v1362 = vrot.slane %v1133, 1
        %v1363 = vsel %vm664, %v1134, %v1362
        %v1364 = vrot.slane %v1135, 7
        %v1365 = vsel %vm667, %v1364, %v1363
        %v1366 = vrot.slane %v1136, 6
        %v1367 = vsel %vm670, %v1366, %v1365
        %v1368 = vrot.slane %v1137, 5
        %v1369 = vsel %vm673, %v1368, %v1367
        %v1370 = vrot.slane %v1138, 4
        %v1371 = vsel %vm676, %v1370, %v1369
        %v1372 = vrot.slane %v1139, 3
        %v1373 = vsel %vm679, %v1372, %v1371
        %v1374 = vrot.slane %v1140, 2
        %v1375 = vsel %vm682, %v1374, %v1373
        %v1376 = vrot.slane %v1141, 1
        %v1377 = vsel %vm664, %v1142, %v1376
        %v1378 = vrot.slane %v1143, 7
        %v1379 = vsel %vm667, %v1378, %v1377
        %v1380 = vrot.slane %v1144, 6
        %v1381 = vsel %vm670, %v1380, %v1379
        %v1382 = vrot.slane %v1145, 5
        %v1383 = vsel %vm673, %v1382, %v1381
        %v1384 = vrot.slane %v1146, 4
        %v1385 = vsel %vm676, %v1384, %v1383
        %v1386 = vrot.slane %v1147, 3
        %v1387 = vsel %vm679, %v1386, %v1385
        %v1388 = vrot.slane %v1148, 2
        %v1389 = vsel %vm682, %v1388, %v1387
        %v1390 = vrot.slane %v1149, 1
        %v1391 = vsel %vm664, %v1150, %v1390
        %v1392 = vrot.slane %v1151, 7
        %v1393 = vsel %vm667, %v1392, %v1391
        %v1394 = vrot.slane %v1152, 6
        %v1395 = vsel %vm670, %v1394, %v1393
        %v1396 = vrot.slane %v1153, 5
        %v1397 = vsel %vm673, %v1396, %v1395
        %v1398 = vrot.slane %v1154, 4
        %v1399 = vsel %vm676, %v1398, %v1397
        %v1400 = vrot.slane %v1155, 3
        %v1401 = vsel %vm679, %v1400, %v1399
        %v1402 = vrot.slane %v1156, 2
        %v1403 = vsel %vm682, %v1402, %v1401
        %v1404 = vrot.slane %v1157, 1
        %v1405 = vsel %vm664, %v1158, %v1404
        %v1406 = vrot.slane %v1159, 7
        %v1407 = vsel %vm667, %v1406, %v1405
        %v1408 = vrot.slane %v1160, 6
        %v1409 = vsel %vm670, %v1408, %v1407
        %v1410 = vrot.slane %v1161, 5
        %v1411 = vsel %vm673, %v1410, %v1409
        %v1412 = vrot.slane %v1162, 4
        %v1413 = vsel %vm676, %v1412, %v1411
        %v1414 = vrot.slane %v1163, 3
        %v1415 = vsel %vm679, %v1414, %v1413
        %v1416 = vrot.slane %v1164, 2
        %v1417 = vsel %vm682, %v1416, %v1415
        %v1418 = vrot.slane %v1165, 1
        %v1419 = vsel %vm664, %v1166, %v1418
        %v1420 = vrot.slane %v1167, 7
        %v1421 = vsel %vm667, %v1420, %v1419
        %v1422 = vrot.slane %v1168, 6
        %v1423 = vsel %vm670, %v1422, %v1421
        %v1424 = vrot.slane %v1169, 5
        %v1425 = vsel %vm673, %v1424, %v1423
        %v1426 = vrot.slane %v1170, 4
        %v1427 = vsel %vm676, %v1426, %v1425
        %v1428 = vrot.slane %v1171, 3
        %v1429 = vsel %vm679, %v1428, %v1427
        %v1430 = vrot.slane %v1172, 2
        %v1431 = vsel %vm682, %v1430, %v1429
        %v1432 = vrot.slane %v1173, 1
        %v1433 = vsel %vm664, %v1174, %v1432
        %v1434 = vrot.slane %v1175, 7
        %v1435 = vsel %vm667, %v1434, %v1433
        %v1436 = vrot.slane %v1176, 6
        %v1437 = vsel %vm670, %v1436, %v1435
        %v1438 = vrot.slane %v1177, 5
        %v1439 = vsel %vm673, %v1438, %v1437
        %v1440 = vrot.slane %v1178, 4
        %v1441 = vsel %vm676, %v1440, %v1439
        %v1442 = vrot.slane %v1179, 3
        %v1443 = vsel %vm679, %v1442, %v1441
        %v1444 = vrot.slane %v1180, 2
        %v1445 = vsel %vm682, %v1444, %v1443
        %v1446 = vrot.slane %v1181, 1
        %v1447 = vsel %vm664, %v1182, %v1446
        %v1448 = vrot.slane %v1183, 7
        %v1449 = vsel %vm667, %v1448, %v1447
        %v1450 = vrot.slane %v1184, 6
        %v1451 = vsel %vm670, %v1450, %v1449
        %v1452 = vrot.slane %v1185, 5
        %v1453 = vsel %vm673, %v1452, %v1451
        %v1454 = vrot.slane %v1186, 4
        %v1455 = vsel %vm676, %v1454, %v1453
        %v1456 = vrot.slane %v1187, 3
        %v1457 = vsel %vm679, %v1456, %v1455
        %v1458 = vrot.slane %v1188, 2
        %v1459 = vsel %vm682, %v1458, %v1457
        %v1460 = vrot.slane %v1189, 1
        %v1461 = vsel %vm664, %v1190, %v1460
        %v1462 = vrot.slane %v1191, 7
        %v1463 = vsel %vm667, %v1462, %v1461
        %v1464 = vrot.slane %v1192, 6
        %v1465 = vsel %vm670, %v1464, %v1463
        %v1466 = vrot.slane %v1193, 5
        %v1467 = vsel %vm673, %v1466, %v1465
        %v1468 = vrot.slane %v1194, 4
        %v1469 = vsel %vm676, %v1468, %v1467
        %v1470 = vrot.slane %v1195, 3
        %v1471 = vsel %vm679, %v1470, %v1469
        %v1472 = vrot.slane %v1196, 2
        %v1473 = vsel %vm682, %v1472, %v1471
        %v1474 = vpack.c.b16 %v1389, %v1375
        %v1475 = vpack.c.b16 %v1417, %v1403
        %v1476 = vpack.c.b16 %v1445, %v1431
        %v1477 = vpack.c.b16 %v1473, %v1459
        %v1479 = vsel %vm798, %v1474, 0
        %v1482 = vsel %vm798, %v1475, 0
        %v1485 = vsel %vm798, %v1476, 0
        %v1488 = vsel %vm798, %v1477, 0
        %1490 = vmatpush.bf16.msra.mxu0 0
        %1491 = vmatpush.bf16.msra.mxu0 0
        %1492 = vmatpush.bf16.msra.mxu0 0
        %1493 = vmatpush.bf16.msra.mxu0 0
        %1494 = vmatpush.bf16.msra.mxu0 0
        %1495 = vmatpush.bf16.msra.mxu0 0
        %1496 = vmatpush.bf16.msra.mxu0 %v795
        %1497 = vmatpush.bf16.msra.mxu0 %v794
        %1498 = vmatmul.bf16.gmra.mxu0 %v1479
        %v1499 = vpop.f32.mrf.mxu0
        %v1500 = vadd.f32 0.0, %v1499
        %v1501 = vpop.f32.mrf.mxu0
        %v1502 = vadd.f32 0.0, %v1501
        %1503 = vmatmul.bf16.gmra.mxu0 %v1482
        %v1504 = vpop.f32.mrf.mxu0
        %v1505 = vadd.f32 0.0, %v1504
        %v1506 = vpop.f32.mrf.mxu0
        %v1507 = vadd.f32 0.0, %v1506
        %1508 = vmatmul.bf16.gmra.mxu0 %v1485
        %v1509 = vpop.f32.mrf.mxu0
        %v1510 = vadd.f32 0.0, %v1509
        %v1511 = vpop.f32.mrf.mxu0
        %v1512 = vadd.f32 0.0, %v1511
        %1513 = vmatmul.bf16.gmra.mxu0 %v1488
        %v1514 = vpop.f32.mrf.mxu0
        %v1515 = vadd.f32 0.0, %v1514
        %v1516 = vpop.f32.mrf.mxu0
        %v1517 = vadd.f32 0.0, %v1516
        %1518 = vdwg.mxu0
        %v1519 = vmax.f32 %v1354, %v1500
        %v1520 = vmax.f32 %v1355, %v1502
        %v1521 = vmax.f32 %v1356, %v1505
        %v1522 = vmax.f32 %v1357, %v1507
        %v1523 = vmax.f32 %v1358, %v1510
        %v1524 = vmax.f32 %v1359, %v1512
        %v1525 = vmax.f32 %v1360, %v1515
        %v1526 = vmax.f32 %v1361, %v1517
        %v1527 = vld [vmem:[%s2] sm:$0x1]
        %v1529 = vperm.slane %v1527, 0
        %v1531 = vadd.f32 %v1519, %v1529
        %v1532 = vadd.f32 %v1520, %v1529
        %v1533 = vadd.f32 %v1521, %v1529
        %v1534 = vadd.f32 %v1522, %v1529
        %v1535 = vadd.f32 %v1523, %v1529
        %v1536 = vadd.f32 %v1524, %v1529
        %v1537 = vadd.f32 %v1525, %v1529
        %v1538 = vadd.f32 %v1526, %v1529
        %v1539 = vpack.c.bf16 %v1531, %v1531
        %v1540 = vpack.c.bf16 %v1532, %v1532
        %v1541 = vpack.c.bf16 %v1533, %v1533
        %v1542 = vpack.c.bf16 %v1534, %v1534
        %v1543 = vpack.c.bf16 %v1535, %v1535
        %v1544 = vpack.c.bf16 %v1536, %v1536
        %v1545 = vpack.c.bf16 %v1537, %v1537
        %v1546 = vpack.c.bf16 %v1538, %v1538
        %vm1547 = vcmask 257024
        %1548 = vst.msk [vmem:[%s209] sm:$0xf] %vm1547, %v1539
        %1549 = vst.msk [vmem:[%s209 + $0x4] sm:$0xf] %vm1547, %v1540
        %1550 = vst.msk [vmem:[%s209 + $0x8] sm:$0xf] %vm1547, %v1541
        %1551 = vst.msk [vmem:[%s209 + $0xc] sm:$0xf] %vm1547, %v1542
        %1552 = vst.msk [vmem:[%s209 + $0x10] sm:$0xf] %vm1547, %v1543
        %1553 = vst.msk [vmem:[%s209 + $0x14] sm:$0xf] %vm1547, %v1544
        %1554 = vst.msk [vmem:[%s209 + $0x18] sm:$0xf] %vm1547, %v1545
        %1555 = vst.msk [vmem:[%s209 + $0x1c] sm:$0xf] %vm1547, %v1546
        %p1556 = scmp.lt.s32.totalorder %s18, 1
        %s1557 = scalar_select %p1556, %s18, 1
        %s1558 = smul.addr %s1557, 8
        %s1559 = smul.addr %s1558, 4
        %s1560 = scalar_lea.vmem %s3, %s1559
        // Predicated region
        $region41: #{tpu_custom_call.1} parent=31 // pred_check
          %p1561 = pneg %p104
        $region42: #{tpu_custom_call.1} parent=31 // pred_check_branch
          %1563 = sbr.rel (%p1561) target = $region44
        $region43: #{tpu_custom_call.1} parent=31 // pred_region
          _
        $region44: #{tpu_custom_call.1} parent=31 // pred_fallthru
          _
      $region32: #{tpu_custom_call.1} parent=5 // pred_fallthru
        _
      %p1564 = scmp.le.s32.totalorder 2, %s13
      // Predicated region
      $region45: #{tpu_custom_call.1} parent=5 // pred_check
        %p1565 = pneg %p1564
      $region46: #{tpu_custom_call.1} parent=5 // pred_check_branch
        %1567 = sbr.rel (%p1565) target = $region48
      $region47: #{tpu_custom_call.1} parent=5 // pred_region
        %s1568 = ssub.s32 %s13, 2
        // Predicated region
        $region49: #{tpu_custom_call.1} parent=47 // pred_check
          %p1569 = pneg %p110
        $region50: #{tpu_custom_call.1} parent=47 // pred_check_branch
          %1571 = sbr.rel (%p1569) target = $region52
        $region51: #{tpu_custom_call.1} parent=47 // pred_region
          %p1572 = scmp.lt.s32.totalorder %s19, 1
          %s1573 = scalar_select %p1572, %s19, 1
          %s1574 = smul.addr %s1573, 8
          %s1575 = smul.addr %s1574, 4
          %s1576 = scalar_lea.vmem %s3, %s1575
        $region52: #{tpu_custom_call.1} parent=47 // pred_fallthru
          _
      $region48: #{tpu_custom_call.1} parent=5 // pred_fallthru
        _
    $region6: #{tpu_custom_call.1} parent=1 // loop_footer
      %s17 = sadd.s32 1, %s13
    $region7: #{tpu_custom_call.1} parent=1 // loop_footer_branch
      %12 = sbr.rel target = $region3
    $region8: #{tpu_custom_call.1} parent=1 // loop_exit
      _
    %1577 = vsyncpa [#allocation3], 1
    %s1578 = scalar_lea.sflag [#allocation3], 1
    %1579 = vsyncpa %s1578, 1
    %1580 = vsyncpa [#allocation5], 1

</llo_original>
